<compile_context>
chip_gen: v5e
topology: v5e:2x2
jax: 0.10.0
libtpu: 0.0.40
codegen_flags: <defaults>
</compile_context>

<pallas_src>
import jax
import jax.numpy as jnp
from jax import lax
from jax.experimental import pallas as pl
from jax.experimental.pallas import tpu as pltpu
import numpy as np


def attn_pool_kernel(x_bnc_ref, x_bcn_ref, cls_ref, wfct_ref, bfc_ref,
                     out_ref, pooled_ref):
    # x_bnc_ref:  (TB, N, C)  raw rows-view of this batch tile
    # x_bcn_ref:  (TB, C, N)  raw channel-major view of this batch tile
    # cls_ref:    (1, C)      cls_vec
    # wfct_ref:   (C, C)      fc weight, already transposed (in_dim, out_dim)
    # bfc_ref:    (1, C)      fc bias
    # out_ref:    (TB, 1, C)
    # pooled_ref: (TB, C)     VMEM scratch holding pooled + cls per element
    tb = x_bnc_ref.shape[0]
    cls_row = cls_ref[...]                                   # (1, C)

    # Per-element attention pooling (static, unrolled over the batch tile).
    for t in range(tb):
        rows = x_bnc_ref[t]                                  # (N, C)
        xcn = x_bcn_ref[t]                                   # (C, N)

        # Lane-dense logits: (1, N)  --  logits[n] = sum_c rows[n, c] * cls[c]
        logits = lax.dot_general(cls_row, rows, (((1,), (1,)), ((), ())),
                                 preferred_element_type=jnp.float32)

        # Softmax over the N positions (lane-axis reductions).
        m = jnp.max(logits, axis=-1, keepdims=True)          # (1, 1)
        e = jnp.exp(logits - m)                              # (1, N)
        w = e / jnp.sum(e, axis=-1, keepdims=True)           # (1, N)

        # pooled[c] = sum_n xcn[c, n] * w[n]                 -> (1, C)
        pooled = lax.dot_general(w, xcn, (((1,), (1,)), ((), ())),
                                 preferred_element_type=jnp.float32)
        pooled_ref[pl.ds(t, 1), :] = pooled + cls_row

    # fc over the whole batch tile at once: (TB, C) @ (C, C) -> (TB, C)
    out = jnp.dot(pooled_ref[...], wfct_ref[...],
                  preferred_element_type=jnp.float32)
    out = out + bfc_ref[...] + cls_row                       # (TB, C)
    out_ref[:, 0, :] = out.astype(out_ref.dtype)


def _pick_tb(batch, channels, positions, itemsize):
    """Batch-tile size: VMEM-bounded (sized for v7x) and >= 2 grid steps."""
    # x is streamed as two raw views, each double-buffered by the pipeline:
    # ~4 * tb * channels * positions * itemsize bytes of VMEM for x blocks.
    budget_bytes = 4 * 1024 * 1024
    per_elem = max(channels * positions * itemsize, 1)
    cap = max(1, budget_bytes // per_elem)
    if batch >= 2:
        # keep at least 2 grid steps so the parallel batch axis can be split
        # across both TensorCores on v7x
        cap = min(cap, max(1, batch // 2))
    tb = 1
    for d in range(1, min(cap, batch) + 1):
        if batch % d == 0:
            tb = d
    return tb


def attention_pooling(x, cls_vec, w_fc, b_fc, *, tb=None):
    B, C = x.shape[0], x.shape[1]
    N = x.size // (B * C)
    itemsize = jnp.dtype(x.dtype).itemsize
    if tb is None:
        tb = _pick_tb(B, C, N, itemsize)
    assert B % tb == 0, "batch tile must divide batch"

    # Raw reinterpretations of the contiguous NCHW buffer (same semantics as
    # torch.reshape on a contiguous tensor). Free reinterpretations in HBM.
    x_bnc = x.reshape(B, N, C)
    x_bcn = x.reshape(B, C, N)
    cls2 = cls_vec.reshape(1, C)
    bfc2 = b_fc.reshape(1, C)
    wfct = w_fc.T            # pre-transpose: kernel does pooled @ wfct

    out = pl.pallas_call(
        attn_pool_kernel,
        out_shape=jax.ShapeDtypeStruct((B, 1, C), x.dtype),
        grid_spec=pltpu.PrefetchScalarGridSpec(
            num_scalar_prefetch=0,
            grid=(B // tb,),
            in_specs=[
                pl.BlockSpec((tb, N, C), lambda b: (b, 0, 0)),
                pl.BlockSpec((tb, C, N), lambda b: (b, 0, 0)),
                pl.BlockSpec((1, C), lambda b: (0, 0)),
                pl.BlockSpec((C, C), lambda b: (0, 0)),
                pl.BlockSpec((1, C), lambda b: (0, 0)),
            ],
            out_specs=pl.BlockSpec((tb, 1, C), lambda b: (b, 0, 0)),
            scratch_shapes=[pltpu.VMEM((tb, C), jnp.float32)],
        ),
        compiler_params=pltpu.CompilerParams(
            dimension_semantics=("parallel",)),
    )(x_bnc, x_bcn, cls2, wfct, bfc2)
    return out.reshape(B, C)


def attention_pooling_ref(x, cls_vec, w_fc, b_fc):
    """Pure-JAX reference mirroring the PyTorch forward exactly."""
    B, C = x.shape[0], x.shape[1]
    logits = x.reshape(-1, C) @ cls_vec
    w = jax.nn.softmax(logits.reshape(B, -1), axis=-1)
    pooled = jnp.einsum('bcn,bn->bc', x.reshape(B, C, -1), w)
    pooled = pooled + cls_vec
    out = pooled @ w_fc.T + b_fc
    return out + cls_vec


if __name__ == "__main__":
    B, C, H, W = 2, 4, 16, 16          # in_dim = C = 4
    key = jax.random.PRNGKey(0)
    kx, kc, kw, kb = jax.random.split(key, 4)

    x = jax.random.normal(kx, (B, C, H, W), dtype=jnp.float32)

    # Deterministic parameter init (shapes from nn.Parameter / nn.Linear(C, C)).
    cls_vec = jax.random.normal(kc, (C,), dtype=jnp.float32)
    bound = 1.0 / np.sqrt(C)
    w_fc = jax.random.uniform(kw, (C, C), dtype=jnp.float32,
                              minval=-bound, maxval=bound)
    b_fc = jax.random.uniform(kb, (C,), dtype=jnp.float32,
                              minval=-bound, maxval=bound)

    out = attention_pooling(x, cls_vec, w_fc, b_fc)
    out = jax.block_until_ready(out)

    ref = attention_pooling_ref(x, cls_vec, w_fc, b_fc)
    assert out.shape == (B, C)
    np.testing.assert_allclose(np.asarray(out), np.asarray(ref),
                               rtol=1e-5, atol=1e-5)
    print("KERNEL_OK")
</pallas_src>

<mosaic_0001>
module attributes {stable_mosaic.version = 11 : i64} {
  func.func @attn_pool_kernel(%arg0: i32, %arg1: memref<1x256x4xf32, #tpu.memory_space<vmem>>, %arg2: memref<1x4x256xf32, #tpu.memory_space<vmem>>, %arg3: memref<1x4xf32, #tpu.memory_space<vmem>>, %arg4: memref<4x4xf32, #tpu.memory_space<vmem>>, %arg5: memref<1x4xf32, #tpu.memory_space<vmem>>, %arg6: memref<1x1x4xf32, #tpu.memory_space<vmem>>, %arg7: memref<1x4xf32, #tpu.memory_space<vmem>>) attributes {dimension_semantics = [#tpu.dimension_semantics<parallel>], iteration_bounds = array<i64: 2>, scalar_prefetch = 0 : i64, scratch_operands = 1 : i64, tpu.core_type = #tpu.core_type<tc>, window_params = [{transform_indices = @transform_0, window_bounds = array<i64: 1, 256, 4>}, {transform_indices = @transform_1, window_bounds = array<i64: 1, 4, 256>}, {pipeline_mode = #tpu.pipeline_mode<synchronous>, transform_indices = @transform_2, window_bounds = array<i64: 1, 4>}, {pipeline_mode = #tpu.pipeline_mode<synchronous>, transform_indices = @transform_3, window_bounds = array<i64: 4, 4>}, {pipeline_mode = #tpu.pipeline_mode<synchronous>, transform_indices = @transform_4, window_bounds = array<i64: 1, 4>}, {transform_indices = @transform_5, window_bounds = array<i64: 1, 1, 4>}]} {
    %c0 = arith.constant 0 : index
    %c0_0 = arith.constant 0 : index
    %0 = vector.load %arg3[%c0, %c0_0] : memref<1x4xf32, #tpu.memory_space<vmem>>, vector<1x4xf32>
    %c0_1 = arith.constant 0 : index
    %c0_2 = arith.constant 0 : index
    %c0_3 = arith.constant 0 : index
    %1 = vector.load %arg1[%c0_1, %c0_2, %c0_3] : memref<1x256x4xf32, #tpu.memory_space<vmem>>, vector<1x256x4xf32>
    %2 = vector.shape_cast %1 : vector<1x256x4xf32> to vector<256x4xf32>
    %c0_4 = arith.constant 0 : index
    %c0_5 = arith.constant 0 : index
    %c0_6 = arith.constant 0 : index
    %3 = vector.load %arg2[%c0_4, %c0_5, %c0_6] : memref<1x4x256xf32, #tpu.memory_space<vmem>>, vector<1x4x256xf32>
    %4 = vector.shape_cast %3 : vector<1x4x256xf32> to vector<4x256xf32>
    %cst = arith.constant dense<0.000000e+00> : vector<1x256xf32>
    %5 = tpu.matmul %0, %2, %cst {dimension_numbers = #tpu.dot_dimension_numbers<[1], [1], [0], [0], [0, 0, 1, 0], [], []>} : vector<1x4xf32>, vector<256x4xf32>, vector<1x256xf32> -> vector<1x256xf32>
    %cst_7 = arith.constant dense<0xFF800000> : vector<1xf32>
    %6 = vector.multi_reduction <maximumf>, %5, %cst_7 [1] : vector<1x256xf32> to vector<1xf32>
    %7 = vector.shape_cast %6 : vector<1xf32> to vector<1x1xf32>
    %8 = vector.broadcast %7 : vector<1x1xf32> to vector<1x256xf32>
    %9 = arith.subf %5, %8 : vector<1x256xf32>
    %10 = math.exp %9 : vector<1x256xf32>
    %cst_8 = arith.constant dense<0.000000e+00> : vector<1xf32>
    %11 = vector.multi_reduction <add>, %10, %cst_8 [1] : vector<1x256xf32> to vector<1xf32>
    %12 = vector.shape_cast %11 : vector<1xf32> to vector<1x1xf32>
    %13 = vector.broadcast %12 : vector<1x1xf32> to vector<1x256xf32>
    %14 = arith.divf %10, %13 : vector<1x256xf32>
    %cst_9 = arith.constant dense<0.000000e+00> : vector<1x4xf32>
    %15 = tpu.matmul %14, %4, %cst_9 {dimension_numbers = #tpu.dot_dimension_numbers<[1], [1], [0], [0], [0, 0, 1, 0], [], []>} : vector<1x256xf32>, vector<4x256xf32>, vector<1x4xf32> -> vector<1x4xf32>
    %16 = arith.addf %15, %0 : vector<1x4xf32>
    %c0_10 = arith.constant 0 : index
    %c0_11 = arith.constant 0 : index
    %17 = vector.load %arg7[%c0_10, %c0_11] : memref<1x4xf32, #tpu.memory_space<vmem>>, vector<1x4xf32>
    tpu.vector_store %arg7[%c0_10, %c0_11], %16 {strides = array<i32>} : memref<1x4xf32, #tpu.memory_space<vmem>>, vector<1x4xf32>,
    %c0_12 = arith.constant 0 : index
    %c0_13 = arith.constant 0 : index
    %18 = vector.load %arg7[%c0_12, %c0_13] : memref<1x4xf32, #tpu.memory_space<vmem>>, vector<1x4xf32>
    %c0_14 = arith.constant 0 : index
    %c0_15 = arith.constant 0 : index
    %19 = vector.load %arg4[%c0_14, %c0_15] : memref<4x4xf32, #tpu.memory_space<vmem>>, vector<4x4xf32>
    %cst_16 = arith.constant dense<0.000000e+00> : vector<1x4xf32>
    %20 = tpu.matmul %18, %19, %cst_16 {dimension_numbers = #tpu.dot_dimension_numbers<[1], [0], [0], [1], [0, 0, 1, 1], [], []>} : vector<1x4xf32>, vector<4x4xf32>, vector<1x4xf32> -> vector<1x4xf32>
    %c0_17 = arith.constant 0 : index
    %c0_18 = arith.constant 0 : index
    %21 = vector.load %arg5[%c0_17, %c0_18] : memref<1x4xf32, #tpu.memory_space<vmem>>, vector<1x4xf32>
    %22 = arith.addf %20, %21 : vector<1x4xf32>
    %23 = arith.addf %22, %0 : vector<1x4xf32>
    %c0_19 = arith.constant 0 : index
    %c0_20 = arith.constant 0 : index
    %c0_21 = arith.constant 0 : index
    %24 = vector.load %arg6[%c0_19, %c0_20, %c0_21] : memref<1x1x4xf32, #tpu.memory_space<vmem>>, vector<1x1x4xf32>
    %25 = vector.shape_cast %24 : vector<1x1x4xf32> to vector<1x4xf32>
    %26 = vector.shape_cast %23 : vector<1x4xf32> to vector<1x1x4xf32>
    tpu.vector_store %arg6[%c0_19, %c0_20, %c0_21], %26 {strides = array<i32>} : memref<1x1x4xf32, #tpu.memory_space<vmem>>, vector<1x1x4xf32>,
    return
  }
  func.func @transform_0(%arg0: i32) -> (i32, i32, i32) {
    %c0_i32 = arith.constant 0 : i32
    %c0_i32_0 = arith.constant 0 : i32
    %c0_i32_1 = arith.constant 0 : i32
    return %arg0, %c0_i32, %c0_i32_0 : i32, i32, i32
  }
  func.func @transform_1(%arg0: i32) -> (i32, i32, i32) {
    %c0_i32 = arith.constant 0 : i32
    %c0_i32_0 = arith.constant 0 : i32
    %c0_i32_1 = arith.constant 0 : i32
    return %arg0, %c0_i32, %c0_i32_0 : i32, i32, i32
  }
  func.func @transform_2(%arg0: i32) -> (i32, i32) {
    %c0_i32 = arith.constant 0 : i32
    %c0_i32_0 = arith.constant 0 : i32
    %c0_i32_1 = arith.constant 0 : i32
    return %c0_i32, %c0_i32_0 : i32, i32
  }
  func.func @transform_3(%arg0: i32) -> (i32, i32) {
    %c0_i32 = arith.constant 0 : i32
    %c0_i32_0 = arith.constant 0 : i32
    %c0_i32_1 = arith.constant 0 : i32
    return %c0_i32, %c0_i32_0 : i32, i32
  }
  func.func @transform_4(%arg0: i32) -> (i32, i32) {
    %c0_i32 = arith.constant 0 : i32
    %c0_i32_0 = arith.constant 0 : i32
    %c0_i32_1 = arith.constant 0 : i32
    return %c0_i32, %c0_i32_0 : i32, i32
  }
  func.func @transform_5(%arg0: i32) -> (i32, i32, i32) {
    %c0_i32 = arith.constant 0 : i32
    %c0_i32_0 = arith.constant 0 : i32
    %c0_i32_1 = arith.constant 0 : i32
    return %arg0, %c0_i32, %c0_i32_0 : i32, i32, i32
  }
}

</mosaic_0001>

<llo_original>
// kernel: tpu_custom_call.1
$region0: #{tpu_custom_call.1}
  #allocation0 [shape = 'u32[]', space=smem, size = 0x4, offset = 0x4, fixed_abs, tag = 'smem constant byte address 0x4 - core index']
  #allocation1 [shape = 'u32[72,128]{1,0:T(1,128)}', space=vmem, size = 0x9000, scoped, tag = 'internal scratch']
  #allocation2 [shape = 'f32[1,4]{1,0:T(1,128)}', space=vmem, size = 0x200, scoped, tag = 'scratch operand']
  %s0 = inlined_call_operand.vmem [shape: f32[2,256,4], index: 0, kind: input, shape index: {}]
  %s1 = inlined_call_operand.vmem [shape: f32[2,4,256], index: 1, kind: input, shape index: {}]
  %s2 = inlined_call_operand.vmem [shape: f32[1,4], index: 2, kind: input, shape index: {}]
  %s3 = inlined_call_operand.vmem [shape: f32[4,4], index: 3, kind: input, shape index: {}]
  %s4 = inlined_call_operand.vmem [shape: f32[1,4], index: 4, kind: input, shape index: {}]
  %s5 = inlined_call_operand.hbm [shape: f32[2,1,4], index: 5, kind: output, shape index: {}]
  %s6 = sld [smem:[#allocation0]]
  $region53: #{tpu_custom_call.1} parent=0
    _
  %s8 = ssub.s32 1, %s6
  %s9 = scalar_select 0, %s8, %s6
  $region1: #{tpu_custom_call.1} parent=0
    #allocation3 [shape = 'u8[1024]{0}', space=vmem, size = 0x400, scoped, tag = 'output window, operand 0']
    #allocation4 [shape = 's32[2]{0}', space=sflag, size = 0x8, scoped, tag = 'scoped memory for tpu_custom_call.1']
    %10 = vsyncpa [#allocation4], 0
    %s11 = scalar_lea.sflag [#allocation4], 1
    %12 = vsyncpa %s11, 0
    loop: start=0, step=1, limit=4
    $region2: #{tpu_custom_call.1} parent=1 // loop_pre_header
      _
    $region3: #{tpu_custom_call.1} parent=1 // loop_header
      %s14 = sphi 0, %s18
      %p15 = scmp.ge.s32.totalorder %s14, 4
      %s24 = sphi 0, %s26
      %s27 = sphi 0, %s24
      %s28 = sphi 0, %s27
      %s44 = sphi 0, %s28
      %s50 = sphi 0, %s52
      %s53 = sphi 0, %s50
      %s54 = sphi 0, %s53
      %s70 = sphi 0, %s54
      %s74 = sphi 0, %s74
      %s76 = sphi 0, %s74
      %s77 = sphi 0, %s76
      %s91 = sphi 0, %s77
      %s95 = sphi 0, %s95
      %s97 = sphi 0, %s95
      %s98 = sphi 0, %s97
      %s112 = sphi 0, %s98
      %s116 = sphi 0, %s116
      %s118 = sphi 0, %s116
      %s119 = sphi 0, %s118
      %s133 = sphi 0, %s119
      %s139 = sphi 0, %s141
      %s142 = sphi 0, %s139
      %s143 = sphi 0, %s142
      %s159 = sphi 0, %s143
    $region4: #{tpu_custom_call.1} parent=1 // loop_header_branch
      %17 = sbr.rel (%p15) target = $region8
    $region5: #{tpu_custom_call.1} parent=1 // loop_body
      %s19 = ssub.s32 %s14, 1
      %s20 = ssub.s32 %s14, 2
      %s21 = sadd.s32 %s14, 1
      %s22 = ssub.s32 %s14, %s21
      %p23 = scmp.eq.s32.totalorder %s22, 0
      %s25 = sadd.s32 %s24, 1
      %s26 = scalar_select %p23, %s24, %s25
      %p29 = pneg %p23
      %p30 = scmp.eq.s32.totalorder %s14, 1
      %p31 = por %p29, %p30
      %p32 = scmp.ne.s32.totalorder %s24, %s27
      %p33 = scmp.eq.s32.totalorder %s14, 0
      %p34 = por %p32, %p33
      %p35 = scmp.ne.s32.totalorder %s24, %s27
      %p36 = scmp.eq.s32.totalorder %s19, 1
      %p37 = por %p35, %p36
      %p38 = scmp.ne.s32.totalorder %s27, %s28
      %p39 = scmp.eq.s32.totalorder %s19, 0
      %p40 = por %p38, %p39
      %p41 = scmp.ne.s32.totalorder %s27, %s28
      %p42 = scmp.eq.s32.totalorder %s20, 1
      %p43 = por %p41, %p42
      %p45 = scmp.ne.s32.totalorder %s28, %s44
      %p46 = scmp.eq.s32.totalorder %s20, 0
      %p47 = por %p45, %p46
      %s48 = ssub.s32 %s14, %s21
      %p49 = scmp.eq.s32.totalorder %s48, 0
      %s51 = sadd.s32 %s50, 1
      %s52 = scalar_select %p49, %s50, %s51
      %p55 = pneg %p49
      %p56 = scmp.eq.s32.totalorder %s14, 1
      %p57 = por %p55, %p56
      %p58 = scmp.ne.s32.totalorder %s50, %s53
      %p59 = scmp.eq.s32.totalorder %s14, 0
      %p60 = por %p58, %p59
      %p61 = scmp.ne.s32.totalorder %s50, %s53
      %p62 = scmp.eq.s32.totalorder %s19, 1
      %p63 = por %p61, %p62
      %p64 = scmp.ne.s32.totalorder %s53, %s54
      %p65 = scmp.eq.s32.totalorder %s19, 0
      %p66 = por %p64, %p65
      %p67 = scmp.ne.s32.totalorder %s53, %s54
      %p68 = scmp.eq.s32.totalorder %s20, 1
      %p69 = por %p67, %p68
      %p71 = scmp.ne.s32.totalorder %s54, %s70
      %p72 = scmp.eq.s32.totalorder %s20, 0
      %p73 = por %p71, %p72
      %s75 = sadd.s32 %s74, 1
      %p78 = scmp.eq.s32.totalorder %s14, 1
      %p79 = scmp.ne.s32.totalorder %s74, %s76
      %p80 = scmp.eq.s32.totalorder %s14, 0
      %p81 = por %p79, %p80
      %p82 = scmp.ne.s32.totalorder %s74, %s76
      %p83 = scmp.eq.s32.totalorder %s19, 1
      %p84 = por %p82, %p83
      %p85 = scmp.ne.s32.totalorder %s76, %s77
      %p86 = scmp.eq.s32.totalorder %s19, 0
      %p87 = por %p85, %p86
      %p88 = scmp.ne.s32.totalorder %s76, %s77
      %p89 = scmp.eq.s32.totalorder %s20, 1
      %p90 = por %p88, %p89
      %p92 = scmp.ne.s32.totalorder %s77, %s91
      %p93 = scmp.eq.s32.totalorder %s20, 0
      %p94 = por %p92, %p93
      %s96 = sadd.s32 %s95, 1
      %p99 = scmp.eq.s32.totalorder %s14, 1
      %p100 = scmp.ne.s32.totalorder %s95, %s97
      %p101 = scmp.eq.s32.totalorder %s14, 0
      %p102 = por %p100, %p101
      %p103 = scmp.ne.s32.totalorder %s95, %s97
      %p104 = scmp.eq.s32.totalorder %s19, 1
      %p105 = por %p103, %p104
      %p106 = scmp.ne.s32.totalorder %s97, %s98
      %p107 = scmp.eq.s32.totalorder %s19, 0
      %p108 = por %p106, %p107
      %p109 = scmp.ne.s32.totalorder %s97, %s98
      %p110 = scmp.eq.s32.totalorder %s20, 1
      %p111 = por %p109, %p110
      %p113 = scmp.ne.s32.totalorder %s98, %s112
      %p114 = scmp.eq.s32.totalorder %s20, 0
      %p115 = por %p113, %p114
      %s117 = sadd.s32 %s116, 1
      %p120 = scmp.eq.s32.totalorder %s14, 1
      %p121 = scmp.ne.s32.totalorder %s116, %s118
      %p122 = scmp.eq.s32.totalorder %s14, 0
      %p123 = por %p121, %p122
      %p124 = scmp.ne.s32.totalorder %s116, %s118
      %p125 = scmp.eq.s32.totalorder %s19, 1
      %p126 = por %p124, %p125
      %p127 = scmp.ne.s32.totalorder %s118, %s119
      %p128 = scmp.eq.s32.totalorder %s19, 0
      %p129 = por %p127, %p128
      %p130 = scmp.ne.s32.totalorder %s118, %s119
      %p131 = scmp.eq.s32.totalorder %s20, 1
      %p132 = por %p130, %p131
      %p134 = scmp.ne.s32.totalorder %s119, %s133
      %p135 = scmp.eq.s32.totalorder %s20, 0
      %p136 = por %p134, %p135
      %s137 = ssub.s32 %s14, %s21
      %p138 = scmp.eq.s32.totalorder %s137, 0
      %s140 = sadd.s32 %s139, 1
      %s141 = scalar_select %p138, %s139, %s140
      %p144 = pneg %p138
      %p145 = scmp.eq.s32.totalorder %s14, 1
      %p146 = por %p144, %p145
      %p147 = scmp.ne.s32.totalorder %s139, %s142
      %p148 = scmp.eq.s32.totalorder %s14, 0
      %p149 = por %p147, %p148
      %p150 = scmp.ne.s32.totalorder %s139, %s142
      %p151 = scmp.eq.s32.totalorder %s19, 1
      %p152 = por %p150, %p151
      %p153 = scmp.ne.s32.totalorder %s142, %s143
      %p154 = scmp.eq.s32.totalorder %s19, 0
      %p155 = por %p153, %p154
      %p156 = scmp.ne.s32.totalorder %s142, %s143
      %p157 = scmp.eq.s32.totalorder %s20, 1
      %p158 = por %p156, %p157
      %p160 = scmp.ne.s32.totalorder %s143, %s159
      %p161 = scmp.eq.s32.totalorder %s20, 0
      %p162 = por %p160, %p161
      %p163 = scmp.le.s32.totalorder 1, %s14
      %p164 = scmp.lt.s32.totalorder %s14, 3
      %p165 = pnand %p163, %p164
      %p166 = pneg %p165
      // Predicated region
      $region9: #{tpu_custom_call.1} parent=5 // pred_check
        _
      $region10: #{tpu_custom_call.1} parent=5 // pred_check_branch
        %168 = sbr.rel (%p165) target = $region12
      $region11: #{tpu_custom_call.1} parent=5 // pred_region
        %s169 = ssub.s32 %s14, 1
        // Predicated region
        $region13: #{tpu_custom_call.1} parent=11 // pred_check
          %p170 = pneg %p87
        $region14: #{tpu_custom_call.1} parent=11 // pred_check_branch
          %172 = sbr.rel (%p170) target = $region16
        $region15: #{tpu_custom_call.1} parent=11 // pred_region
          _
        $region16: #{tpu_custom_call.1} parent=11 // pred_fallthru
          _
        // Predicated region
        $region17: #{tpu_custom_call.1} parent=11 // pred_check
          %p173 = pneg %p108
        $region18: #{tpu_custom_call.1} parent=11 // pred_check_branch
          %175 = sbr.rel (%p173) target = $region20
        $region19: #{tpu_custom_call.1} parent=11 // pred_region
          _
        $region20: #{tpu_custom_call.1} parent=11 // pred_fallthru
          _
        // Predicated region
        $region21: #{tpu_custom_call.1} parent=11 // pred_check
          %p176 = pneg %p129
        $region22: #{tpu_custom_call.1} parent=11 // pred_check_branch
          %178 = sbr.rel (%p176) target = $region24
        $region23: #{tpu_custom_call.1} parent=11 // pred_region
          _
        $region24: #{tpu_custom_call.1} parent=11 // pred_fallthru
          _
      $region12: #{tpu_custom_call.1} parent=5 // pred_fallthru
        _
      %p179 = scmp.lt.s32.totalorder %s14, 2
      // Predicated region
      $region25: #{tpu_custom_call.1} parent=5 // pred_check
        %p180 = pneg %p179
      $region26: #{tpu_custom_call.1} parent=5 // pred_check_branch
        %182 = sbr.rel (%p180) target = $region28
      $region27: #{tpu_custom_call.1} parent=5 // pred_region
        // Predicated region
        $region29: #{tpu_custom_call.1} parent=27 // pred_check
          %p183 = pneg %p34
        $region30: #{tpu_custom_call.1} parent=27 // pred_check_branch
          %185 = sbr.rel (%p183) target = $region32
        $region31: #{tpu_custom_call.1} parent=27 // pred_region
          %p186 = scmp.lt.s32.totalorder %s14, 1
          %s187 = scalar_select %p186, %s14, 1
          %s188 = smul.addr %s187, 32
          %s189 = smul.addr %s188, 8
          %s190 = scalar_lea.vmem %s0, %s189
        $region32: #{tpu_custom_call.1} parent=27 // pred_fallthru
          _
        // Predicated region
        $region33: #{tpu_custom_call.1} parent=27 // pred_check
          %p191 = pneg %p60
        $region34: #{tpu_custom_call.1} parent=27 // pred_check_branch
          %193 = sbr.rel (%p191) target = $region36
        $region35: #{tpu_custom_call.1} parent=27 // pred_region
          %p194 = scmp.lt.s32.totalorder %s14, 1
          %s195 = scalar_select %p194, %s14, 1
          %s196 = smul.addr %s195, 2
          %s197 = smul.addr %s196, 4
          %s198 = scalar_lea.vmem %s1, %s197
        $region36: #{tpu_custom_call.1} parent=27 // pred_fallthru
          _
      $region28: #{tpu_custom_call.1} parent=5 // pred_fallthru
        _
      %p199 = scmp.le.s32.totalorder 1, %s14
      %p200 = scmp.lt.s32.totalorder %s14, 3
      %p201 = pnand %p199, %p200
      %p202 = pneg %p201
      // Predicated region
      $region37: #{tpu_custom_call.1} parent=5 // pred_check
        _
      $region38: #{tpu_custom_call.1} parent=5 // pred_check_branch
        %204 = sbr.rel (%p201) target = $region40
      $region39: #{tpu_custom_call.1} parent=5 // pred_region
        %s205 = ssub.s32 %s14, 1
        %p206 = scmp.lt.s32.totalorder %s19, 1
        %s207 = scalar_select %p206, %s19, 1
        %s208 = smul.addr %s207, 32
        %s209 = smul.addr %s208, 8
        %s210 = scalar_lea.vmem %s0, %s209
        %p211 = pneg %p40
        %p212 = pneg %p37
        %p213 = scmp.lt.s32.totalorder %s19, 1
        %s214 = scalar_select %p213, %s19, 1
        %s215 = smul.addr %s214, 2
        %s216 = smul.addr %s215, 4
        %s217 = scalar_lea.vmem %s1, %s216
        %p218 = pneg %p66
        %p219 = pneg %p63
        %p220 = pneg %p87
        %p221 = pneg %p84
        %p222 = pneg %p108
        %p223 = pneg %p105
        %p224 = pneg %p129
        %p225 = pneg %p126
        %p226 = pneg %p155
        %p227 = pneg %p152
        %s228 = sand.u32 %s142, 1
        %s229 = scalar_lea.sflag [#allocation4], %s228
        %s230 = sand.u32 %s142, 1
        %s231 = scalar_lea.vmem [#allocation3], %s230
        %p232 = scmp.lt.s32.totalorder %s19, 1
        %s233 = scalar_select %p232, %s19, 1
        %s234 = smul.addr %s233, 32
        %s235 = smul.addr %s234, 8
        %s236 = scalar_lea.vmem %s0, %s235
        %p237 = scmp.lt.s32.totalorder %s19, 1
        %s238 = scalar_select %p237, %s19, 1
        %s239 = smul.addr %s238, 2
        %s240 = smul.addr %s239, 4
        %s241 = scalar_lea.vmem %s1, %s240
        %v242 = vld [vmem:[%s2] sm:$0x1]
        %v243 = vld [vmem:[%s236] sm:$0xff]
        %v244 = vld [vmem:[%s236 + $0x8] sm:$0xff]
        %v245 = vld [vmem:[%s236 + $0x10] sm:$0xff]
        %v246 = vld [vmem:[%s236 + $0x18] sm:$0xff]
        %v247 = vld [vmem:[%s236 + $0x20] sm:$0xff]
        %v248 = vld [vmem:[%s236 + $0x28] sm:$0xff]
        %v249 = vld [vmem:[%s236 + $0x30] sm:$0xff]
        %v250 = vld [vmem:[%s236 + $0x38] sm:$0xff]
        %v251 = vld [vmem:[%s236 + $0x40] sm:$0xff]
        %v252 = vld [vmem:[%s236 + $0x48] sm:$0xff]
        %v253 = vld [vmem:[%s236 + $0x50] sm:$0xff]
        %v254 = vld [vmem:[%s236 + $0x58] sm:$0xff]
        %v255 = vld [vmem:[%s236 + $0x60] sm:$0xff]
        %v256 = vld [vmem:[%s236 + $0x68] sm:$0xff]
        %v257 = vld [vmem:[%s236 + $0x70] sm:$0xff]
        %v258 = vld [vmem:[%s236 + $0x78] sm:$0xff]
        %v259 = vld [vmem:[%s236 + $0x80] sm:$0xff]
        %v260 = vld [vmem:[%s236 + $0x88] sm:$0xff]
        %v261 = vld [vmem:[%s236 + $0x90] sm:$0xff]
        %v262 = vld [vmem:[%s236 + $0x98] sm:$0xff]
        %v263 = vld [vmem:[%s236 + $0xa0] sm:$0xff]
        %v264 = vld [vmem:[%s236 + $0xa8] sm:$0xff]
        %v265 = vld [vmem:[%s236 + $0xb0] sm:$0xff]
        %v266 = vld [vmem:[%s236 + $0xb8] sm:$0xff]
        %v267 = vld [vmem:[%s236 + $0xc0] sm:$0xff]
        %v268 = vld [vmem:[%s236 + $0xc8] sm:$0xff]
        %v269 = vld [vmem:[%s236 + $0xd0] sm:$0xff]
        %v270 = vld [vmem:[%s236 + $0xd8] sm:$0xff]
        %v271 = vld [vmem:[%s236 + $0xe0] sm:$0xff]
        %v272 = vld [vmem:[%s236 + $0xe8] sm:$0xff]
        %v273 = vld [vmem:[%s236 + $0xf0] sm:$0xff]
        %v274 = vld [vmem:[%s236 + $0xf8] sm:$0xff]
        %v275 = vld [vmem:[%s241] sm:$0xff]
        %vm276 = vcmask 31744
        %v278 = vsel %vm276, %v242, 0
        %v281 = vsel %vm276, %v243, 0
        %v284 = vsel %vm276, %v244, 0
        %v287 = vsel %vm276, %v245, 0
        %v290 = vsel %vm276, %v246, 0
        %v293 = vsel %vm276, %v247, 0
        %v296 = vsel %vm276, %v248, 0
        %v299 = vsel %vm276, %v249, 0
        %v302 = vsel %vm276, %v250, 0
        %v305 = vsel %vm276, %v251, 0
        %v308 = vsel %vm276, %v252, 0
        %v311 = vsel %vm276, %v253, 0
        %v314 = vsel %vm276, %v254, 0
        %v317 = vsel %vm276, %v255, 0
        %v320 = vsel %vm276, %v256, 0
        %v323 = vsel %vm276, %v257, 0
        %v326 = vsel %vm276, %v258, 0
        %v329 = vsel %vm276, %v259, 0
        %v332 = vsel %vm276, %v260, 0
        %v335 = vsel %vm276, %v261, 0
        %v338 = vsel %vm276, %v262, 0
        %v341 = vsel %vm276, %v263, 0
        %v344 = vsel %vm276, %v264, 0
        %v347 = vsel %vm276, %v265, 0
        %v350 = vsel %vm276, %v266, 0
        %v353 = vsel %vm276, %v267, 0
        %v356 = vsel %vm276, %v268, 0
        %v359 = vsel %vm276, %v269, 0
        %v362 = vsel %vm276, %v270, 0
        %v365 = vsel %vm276, %v271, 0
        %v368 = vsel %vm276, %v272, 0
        %v371 = vsel %vm276, %v273, 0
        %v374 = vsel %vm276, %v274, 0
        %376 = vmatpush.xpose.msra.mxu0 %v326
        %377 = vmatpush.xpose.msra.mxu0 %v323
        %378 = vmatpush.xpose.msra.mxu0 %v320
        %379 = vmatpush.xpose.msra.mxu0 %v317
        %380 = vmatpush.xpose.msra.mxu0 %v314
        %381 = vmatpush.xpose.msra.mxu0 %v311
        %382 = vmatpush.xpose.msra.mxu0 %v308
        %383 = vmatpush.xpose.msra.mxu0 %v305
        %384 = vmatpush.xpose.msra.mxu0 %v302
        %385 = vmatpush.xpose.msra.mxu0 %v299
        %386 = vmatpush.xpose.msra.mxu0 %v296
        %387 = vmatpush.xpose.msra.mxu0 %v293
        %388 = vmatpush.xpose.msra.mxu0 %v290
        %389 = vmatpush.xpose.msra.mxu0 %v287
        %390 = vmatpush.xpose.msra.mxu0 %v284
        %391 = vmatpush.xpose.msra.mxu0 %v281
        %392 = vmatmul.f32.gmra.mxu0 %v278
        %v393 = vpop.f32.mrf.mxu0
        %v394 = vadd.f32 0.0, %v393
        %395 = vdwg.mxu0
        %396 = vmatpush.xpose.msra.mxu0 %v374
        %397 = vmatpush.xpose.msra.mxu0 %v371
        %398 = vmatpush.xpose.msra.mxu0 %v368
        %399 = vmatpush.xpose.msra.mxu0 %v365
        %400 = vmatpush.xpose.msra.mxu0 %v362
        %401 = vmatpush.xpose.msra.mxu0 %v359
        %402 = vmatpush.xpose.msra.mxu0 %v356
        %403 = vmatpush.xpose.msra.mxu0 %v353
        %404 = vmatpush.xpose.msra.mxu0 %v350
        %405 = vmatpush.xpose.msra.mxu0 %v347
        %406 = vmatpush.xpose.msra.mxu0 %v344
        %407 = vmatpush.xpose.msra.mxu0 %v341
        %408 = vmatpush.xpose.msra.mxu0 %v338
        %409 = vmatpush.xpose.msra.mxu0 %v335
        %410 = vmatpush.xpose.msra.mxu0 %v332
        %411 = vmatpush.xpose.msra.mxu0 %v329
        %412 = vmatmul.f32.gmra.mxu0 %v278
        %v413 = vpop.f32.mrf.mxu0
        %v414 = vadd.f32 0.0, %v413
        %415 = vdwg.mxu0
        %vm416 = vcmask 1040384
        %v417 = vsel %vm416, %v394, -inf
        %v418 = vsel %vm416, %v414, -inf
        %v419 = vmax.f32 %v417, %v418
        %420 = vmax.xlane.f32.xlu0 %v419
        %v421 = vpop.xlane.xlu0 %420
        %v422 = vsub.f32 %v394, %v421
        %v423 = vsub.f32 %v414, %v421
        %v424 = vmul.f32 %v422, 1.442695
        %v425 = vpow.pop %v424
        %v426 = vmul.f32 %v423, 1.442695
        %v427 = vpow.pop %v426
        %v428 = vsel %vm416, %v425, 0.0
        %v429 = vsel %vm416, %v427, 0.0
        %v430 = vadd.f32 %v428, %v429
        %431 = vadd.xlane.f32.xlu0 %v430
        %v432 = vpop.xlane.xlu0 %431
        %v433 = vrcp.pop %v432
        %v434 = vmul.f32 %v432, %v433
        %v435 = vsub.f32 1.0, %v434
        %v436 = vmul.f32 %v433, %v435
        %v437 = vadd.f32 %v433, %v436
        %vm438 = vweird.f32 %v432
        %vm439 = vweird.f32 %v433
        %vm440 = vmor %vm438, %vm439
        %v441 = vsel %vm440, %v433, %v437
        %v442 = vand.u32 2147483647, %v432
        %vm443 = vcmp.eq.f32.partialorder %v442, 8.507059e+37
        %v444 = vand.u32 %v432, 2147483648
        %v445 = vor.u32 1.1754944e-38, %v444
        %v446 = vsel %vm443, %v445, %v441
        %v447 = vmul.f32 %v425, %v446
        %v448 = vmul.f32 %v427, %v446
        %450 = vst [vmem:[#allocation1] ss:$2 sm:$0xff] %v275
        %v451 = vld.sshfl [vmem:[#allocation1] sm:$0xff pattern:$0x75316420]
        %v452 = vld.sshfl [vmem:[#allocation1 + $0x8] sm:$0xff pattern:$0x75316420]
        %455 = vmatpush.xpose.msra.mxu0 0.0
        %456 = vmatpush.xpose.msra.mxu0 0.0
        %457 = vmatpush.xpose.msra.mxu0 0.0
        %458 = vmatpush.xpose.msra.mxu0 0.0
        %459 = vmatpush.xpose.msra.mxu0 0.0
        %460 = vmatpush.xpose.msra.mxu0 0.0
        %461 = vmatpush.xpose.msra.mxu0 0.0
        %462 = vmatpush.xpose.msra.mxu0 0.0
        %463 = vmatpush.xpose.msra.mxu0 0.0
        %464 = vmatpush.xpose.msra.mxu0 0.0
        %465 = vmatpush.xpose.msra.mxu0 0.0
        %466 = vmatpush.xpose.msra.mxu0 0.0
        %467 = vmatpush.xpose.msra.mxu0 0.0
        %468 = vmatpush.xpose.msra.mxu0 0.0
        %469 = vmatpush.xpose.msra.mxu0 0.0
        %470 = vmatpush.xpose.msra.mxu0 %v451
        %471 = vmatmul.f32.gmra.mxu0 %v447
        %v472 = vpop.f32.mrf.mxu0
        %v473 = vadd.f32 %v242, %v472
        %474 = vdwg.mxu0
        %475 = vmatpush.xpose.msra.mxu0 0.0
        %476 = vmatpush.xpose.msra.mxu0 0.0
        %477 = vmatpush.xpose.msra.mxu0 0.0
        %478 = vmatpush.xpose.msra.mxu0 0.0
        %479 = vmatpush.xpose.msra.mxu0 0.0
        %480 = vmatpush.xpose.msra.mxu0 0.0
        %481 = vmatpush.xpose.msra.mxu0 0.0
        %482 = vmatpush.xpose.msra.mxu0 0.0
        %483 = vmatpush.xpose.msra.mxu0 0.0
        %484 = vmatpush.xpose.msra.mxu0 0.0
        %485 = vmatpush.xpose.msra.mxu0 0.0
        %486 = vmatpush.xpose.msra.mxu0 0.0
        %487 = vmatpush.xpose.msra.mxu0 0.0
        %488 = vmatpush.xpose.msra.mxu0 0.0
        %489 = vmatpush.xpose.msra.mxu0 0.0
        %490 = vmatpush.xpose.msra.mxu0 %v452
        %491 = vmatmul.f32.gmra.mxu0 %v448
        %v492 = vpop.f32.mrf.mxu0
        %v493 = vadd.f32 %v473, %v492
        %494 = vdwg.mxu0
        %vm495 = vcmask 24576
        %496 = vst.msk [vmem:[#allocation2] sm:$0x1] %vm495, %v493
        %v497 = vld [vmem:[#allocation2] sm:$0x1]
        %v498 = vld [vmem:[%s3] sm:$0xf]
        %v499 = vld [vmem:[%s4] sm:$0x1]
        %v501 = vsel %vm276, %v497, 0
        %vm503 = vcmask 1043456
        %v505 = vsel %vm503, %v498, 0
        %507 = vmatpush.msra.mxu0 0.0
        %508 = vmatpush.msra.mxu0 0.0
        %509 = vmatpush.msra.mxu0 0.0
        %510 = vmatpush.msra.mxu0 0.0
        %511 = vmatpush.msra.mxu0 0.0
        %512 = vmatpush.msra.mxu0 0.0
        %513 = vmatpush.msra.mxu0 0.0
        %514 = vmatpush.msra.mxu0 0.0
        %515 = vmatpush.msra.mxu0 0.0
        %516 = vmatpush.msra.mxu0 0.0
        %517 = vmatpush.msra.mxu0 0.0
        %518 = vmatpush.msra.mxu0 0.0
        %519 = vmatpush.msra.mxu0 0.0
        %520 = vmatpush.msra.mxu0 0.0
        %521 = vmatpush.msra.mxu0 0.0
        %522 = vmatpush.msra.mxu0 %v505
        %523 = vmatmul.f32.gmra.mxu0 %v501
        %v524 = vpop.f32.mrf.mxu0
        %v525 = vadd.f32 %v499, %v524
        %526 = vdwg.mxu0
        %v527 = vadd.f32 %v525, %v242
        %528 = vst.msk [vmem:[%s231] sm:$0x1] %vm495, %v527
        %s529 = sand.u32 %s142, 1
        %s530 = scalar_lea.sflag [#allocation4], %s529
        %s531 = sand.u32 %s142, 1
        %s532 = scalar_lea.vmem [#allocation3], %s531
        // Predicated region
        $region41: #{tpu_custom_call.1} parent=39 // pred_check
          %p533 = pneg %p152
        $region42: #{tpu_custom_call.1} parent=39 // pred_check_branch
          %535 = sbr.rel (%p533) target = $region44
        $region43: #{tpu_custom_call.1} parent=39 // pred_region
          %537 = vsyncadd %s530, 0
          %s538 = scalar_lea.hbm %s5, %s19
          %s540 = sshll.u32 %s532, 4
          %s541 = int_to_ptr.vmem [resolvable:$true] %s540
          %s542 = sshll.u32 %s538, 4
          %s543 = int_to_ptr.hbm [resolvable:$true] %s542
          %545 = dma.vmem_to_hbm [thread:$0]  %s541, 16, %s543, %s530
        $region44: #{tpu_custom_call.1} parent=39 // pred_fallthru
          _
      $region40: #{tpu_custom_call.1} parent=5 // pred_fallthru
        _
      %p546 = scmp.le.s32.totalorder 2, %s14
      // Predicated region
      $region45: #{tpu_custom_call.1} parent=5 // pred_check
        %p547 = pneg %p546
      $region46: #{tpu_custom_call.1} parent=5 // pred_check_branch
        %549 = sbr.rel (%p547) target = $region48
      $region47: #{tpu_custom_call.1} parent=5 // pred_region
        %s550 = ssub.s32 %s14, 2
        // Predicated region
        $region49: #{tpu_custom_call.1} parent=47 // pred_check
          %p551 = pneg %p158
        $region50: #{tpu_custom_call.1} parent=47 // pred_check_branch
          %553 = sbr.rel (%p551) target = $region52
        $region51: #{tpu_custom_call.1} parent=47 // pred_region
          %s554 = sand.u32 %s143, 1
          %s555 = scalar_lea.sflag [#allocation4], %s554
          %s556 = sand.u32 %s143, 1
          %s557 = scalar_lea.vmem [#allocation3], %s556
          %559 = dma.done %s555, 16
        $region52: #{tpu_custom_call.1} parent=47 // pred_fallthru
          _
      $region48: #{tpu_custom_call.1} parent=5 // pred_fallthru
        _
    $region6: #{tpu_custom_call.1} parent=1 // loop_footer
      %s18 = sadd.s32 1, %s14
    $region7: #{tpu_custom_call.1} parent=1 // loop_footer_branch
      %13 = sbr.rel target = $region3
    $region8: #{tpu_custom_call.1} parent=1 // loop_exit
      _
    %560 = vsyncpa [#allocation4], 1
    %s561 = scalar_lea.sflag [#allocation4], 1
    %562 = vsyncpa %s561, 1

</llo_original>
